<compile_context>
chip_gen: v7x
topology: tpu7x:2x2x1
jax: 0.10.0
libtpu: 0.0.40
codegen_flags: <defaults>
</compile_context>

<pallas_src>
import functools

import numpy as np
import jax
import jax.numpy as jnp
from jax import lax
from jax.experimental import pallas as pl
from jax.experimental.pallas import tpu as pltpu

_F32_MIN = float(np.finfo(np.float32).min)  # sentinel for padded lanes (never gathered/counted)


def _wos_kernel(patches_ref, mask_ref, lhs_ref, bias_ref, out_ref, *, D, N, M, NP):
    """Fused WOS hot path: mask-add, mirror/concat, pairwise stable-descending order,
    rank + cumulative sorted weight via ONE fused MXU contraction, threshold count, gather."""
    p = patches_ref[...]                        # (TB, D) f32
    msk = mask_ref[...]                         # (1, D)
    lhs = lhs_ref[...]                          # (2, M) f32: row0=ones, row1=weights (0 past N)
    TB = p.shape[0]

    xi = p + msk                                # x = mask + input
    parts = [xi, -xi]
    if NP > N:
        # sentinel lanes: smaller than any real value, excluded from count & gather below
        parts.append(jnp.full((TB, NP - N), _F32_MIN, jnp.float32))
    mx = jnp.concatenate(parts, axis=1)         # (TB, NP)

    # ge[b, m, j] = 1 iff element m sorts at-or-before element j under the stable descending
    # order (value desc, index asc on ties).  The "other" axis m only needs the first M
    # (= round_up(N, 8)) candidates; the tie-break mask is a single 2-D triangle reused
    # across the batch.
    vm = mx[:, :M, None]                        # (TB, M, 1)  value at "other" index m (sublanes)
    vj = mx[:, None, :]                         # (TB, 1, NP) value at "self"  index j (lanes)
    im = lax.broadcasted_iota(jnp.int32, (M, NP), 0)
    ij = lax.broadcasted_iota(jnp.int32, (M, NP), 1)
    tri = im <= ij                              # (M, NP) tie-break mask
    ge = (vm > vj) | ((vm == vj) & tri[None])   # (TB, M, NP) bool
    gef = jnp.where(ge, 1.0, 0.0).astype(jnp.bfloat16)   # exact 0/1, half-width MXU operand

    # One fused skinny batched MXU contraction over m.
    #   row 0: rank[j] + 1  (sums of exact 1.0s, f32 accumulate -> exact)
    #   row 1: cw[j]        (exact here because the demo weights are bf16-representable;
    #                        for arbitrary f32 weights near the bias threshold, keep gef/lhs
    #                        in f32 or force jax.default_matmul_precision("highest"))
    lhs_b = jnp.broadcast_to(lhs.astype(jnp.bfloat16)[None], (TB, 2, M))  # tiny, once per step
    rc = jnp.einsum("bcm,bmj->bcj", lhs_b, gef,
                    preferred_element_type=jnp.float32)   # (TB, 2, NP)
    rank = rc[:, 0:1, :] - 1.0                             # (TB, 1, NP)
    cw = rc[:, 1:2, :]                                     # (TB, 1, NP)

    # li = clamp(#{real j : cw[j] <= bias} - 1, 0, N-1); the count is permutation invariant,
    # so it equals #{t : accw[t] <= bias} of the reference cumsum over the sorted weights.
    bias = bias_ref[0, 0]                                  # scalar read from SMEM
    lanej = lax.broadcasted_iota(jnp.int32, (1, 1, NP), 2)
    valid = lanej < N                                      # exclude padded lanes
    cnt = jnp.sum(jnp.where(valid & (cw <= bias), 1.0, 0.0),
                  axis=2, keepdims=True)                   # (TB, 1, 1)
    li = jnp.clip(cnt - 1.0, 0.0, float(N - 1))

    # y = the mx value whose (unique among real lanes) rank equals li.
    y = jnp.sum(jnp.where(valid & (rank == li), vj, 0.0),
                axis=2, keepdims=True)                     # (TB, 1, 1)

    out_ref[...] = jnp.broadcast_to(y[:, 0, :], out_ref.shape)   # lane-dense (TB, 128) store


def wos_forward(x, mask, weight, bias, kernel_size, block_b=128):
    """x: (B, C, H, W) with H == W == kernel_size (single unfold patch)."""
    B, C, H, W = x.shape
    k = kernel_size
    assert H == k and W == k, "exact torch semantics require a single unfold patch (L == 1)"
    D = C * k * k
    N = 2 * D
    assert mask.shape == (1, D) and weight.shape == (1, N) and bias.shape == (1, 1)

    NP = pl.cdiv(N, 128) * 128          # lane ("self" j) axis -> full 128-lane tiles
    M = pl.cdiv(N, 8) * 8               # contraction ("other" m) axis -> multiple of 8 only
    OUT_LANES = 128                     # lane-dense output slab width

    # Batch tile: multiple of 8, big enough to amortize per-grid-step overhead, but capped so
    # the "parallel" grid keeps >= 2 steps when the batch allows (v7x has 2 TensorCores/chip).
    b8 = pl.cdiv(B, 8) * 8
    tb = min(block_b, b8)
    if b8 >= 16:
        tb = min(tb, pl.cdiv(pl.cdiv(b8, 2), 8) * 8)
    tb = max(tb, 8)
    G = pl.cdiv(B, tb)
    BP = G * tb

    # nn.Unfold with a single patch == flatten (C, kh, kw) in C-major order.
    patches = jnp.pad(x.reshape(B, D).astype(jnp.float32), ((0, BP - B), (0, 0)))
    # Fused 2-row LHS shared across the batch: row 0 = ones (rank), row 1 = weights (cw).
    lhs = jnp.concatenate([jnp.ones((1, N), jnp.float32),
                           weight.astype(jnp.float32)], axis=0)
    lhs = jnp.pad(lhs, ((0, 0), (0, M - N)))                       # (2, M), zeros past N

    kernel = functools.partial(_wos_kernel, D=D, N=N, M=M, NP=NP)
    out = pl.pallas_call(
        kernel,
        out_shape=jax.ShapeDtypeStruct((BP, OUT_LANES), jnp.float32),
        grid=(G,),
        in_specs=[
            pl.BlockSpec((tb, D), lambda i: (i, 0)),
            pl.BlockSpec((1, D), lambda i: (0, 0)),
            pl.BlockSpec((2, M), lambda i: (0, 0)),
            pl.BlockSpec(memory_space=pltpu.MemorySpace.SMEM),     # bias scalar in SMEM
        ],
        out_specs=pl.BlockSpec((tb, OUT_LANES), lambda i: (i, 0)),
        compiler_params=pltpu.CompilerParams(
            dimension_semantics=("parallel",)),                    # megacore-shardable batch
    )(patches, mask.astype(jnp.float32), lhs, bias.astype(jnp.float32))

    # result.view(-1, out_channels, L_sqrt, L_sqrt) with out_channels = 1, L_sqrt = 1
    return out[:B, 0].reshape(B, 1, 1, 1)


def wos_reference(x, mask, weight, bias, kernel_size):
    """Pure-JAX reference reproducing the PyTorch OHMWosFunction forward."""
    B, C, H, W = x.shape
    k = kernel_size
    D = C * k * k
    N = 2 * D
    patches = x.reshape(B, D)
    xi = patches + mask
    mx = jnp.concatenate([xi, -xi], axis=1)
    si = jnp.argsort(-mx, axis=1)                        # stable descending sort
    smx = jnp.take_along_axis(mx, si, axis=1)
    allw = jnp.broadcast_to(weight, (B, N))
    sw = jnp.take_along_axis(allw, si, axis=1)
    accw = jnp.cumsum(sw, axis=1)
    li = jnp.sum((accw <= bias).astype(jnp.int32), axis=1, keepdims=True) - 1
    li = jnp.clip(li, 0, N - 1)
    y = jnp.take_along_axis(smx, li, axis=1)
    return y.reshape(B, 1, 1, 1)


if __name__ == "__main__":
    key = jax.random.PRNGKey(0)
    k_x, k_w, k_m = jax.random.split(key, 3)

    # Small shapes consistent with the module: batch=2, in_channels=4, kernel_size=3,
    # spatial = kernel_size (single unfold patch), out_channels=1.
    B, C, ks = 2, 4, 3
    out_channels = 1
    D = C * ks * ks

    x = jax.random.normal(k_x, (B, C, ks, ks), dtype=jnp.float32)

    # Parameters with the shapes from WOS.__init__ (out_channels, 2*D)/(.., D)/(.., 1).
    # Weights are perturbed from the default all-ones init so the order/cumulative-weight path
    # is genuinely exercised; they are multiples of 1/128 in [1, 1.5) so they are exactly
    # bf16-representable and the fused MXU contraction is exact.
    weight = 1.0 + jax.random.randint(k_w, (out_channels, 2 * D), 0, 64).astype(jnp.float32) / 128.0
    bias = jnp.full((out_channels, 1), D + 0.5, dtype=jnp.float32)
    mask = 0.1 * jax.random.normal(k_m, (out_channels, D), dtype=jnp.float32)

    out = wos_forward(x, mask, weight, bias, ks)
    out = jax.block_until_ready(out)

    ref = wos_reference(x, mask, weight, bias, ks)
    np.testing.assert_allclose(np.asarray(out), np.asarray(ref), rtol=1e-6, atol=1e-6)
    assert out.shape == (B, out_channels, 1, 1)
    print("KERNEL_OK")
</pallas_src>

<mosaic_0001>
module attributes {stable_mosaic.version = 11 : i64} {
  func.func @_wos_kernel(%arg0: i32, %arg1: memref<8x36xf32, #tpu.memory_space<vmem>>, %arg2: memref<1x36xf32, #tpu.memory_space<vmem>>, %arg3: memref<2x72xf32, #tpu.memory_space<vmem>>, %arg4: memref<1x1xf32, #tpu.memory_space<smem>>, %arg5: memref<8x128xf32, #tpu.memory_space<vmem>>) attributes {dimension_semantics = [#tpu.dimension_semantics<parallel>], iteration_bounds = array<i64: 1>, scalar_prefetch = 0 : i64, scratch_operands = 0 : i64, tpu.core_type = #tpu.core_type<tc>, window_params = [{transform_indices = @transform_0, window_bounds = array<i64: 8, 36>}, {pipeline_mode = #tpu.pipeline_mode<synchronous>, transform_indices = @transform_1, window_bounds = array<i64: 1, 36>}, {pipeline_mode = #tpu.pipeline_mode<synchronous>, transform_indices = @transform_2, window_bounds = array<i64: 2, 72>}, {transform_indices = @transform_3, window_bounds = array<i64: 1, 1>}, {transform_indices = @transform_4, window_bounds = array<i64: 8, 128>}]} {
    %c0 = arith.constant 0 : index
    %c0_0 = arith.constant 0 : index
    %0 = vector.load %arg1[%c0, %c0_0] : memref<8x36xf32, #tpu.memory_space<vmem>>, vector<8x36xf32>
    %c0_1 = arith.constant 0 : index
    %c0_2 = arith.constant 0 : index
    %1 = vector.load %arg2[%c0_1, %c0_2] : memref<1x36xf32, #tpu.memory_space<vmem>>, vector<1x36xf32>
    %c0_3 = arith.constant 0 : index
    %c0_4 = arith.constant 0 : index
    %2 = vector.load %arg3[%c0_3, %c0_4] : memref<2x72xf32, #tpu.memory_space<vmem>>, vector<2x72xf32>
    %3 = vector.broadcast %1 : vector<1x36xf32> to vector<8x36xf32>
    %4 = arith.addf %0, %3 : vector<8x36xf32>
    %cst = arith.constant 0.000000e+00 : f32
    %5 = vector.broadcast %cst : f32 to vector<8x36xf32>
    %6 = arith.subf %5, %4 : vector<8x36xf32>
    %cst_5 = arith.constant -3.40282347E+38 : f32
    %7 = vector.broadcast %cst_5 : f32 to vector<8x56xf32>
    %8 = tpu.concatenate %4, %6, %7 in 1 : vector<8x36xf32>, vector<8x36xf32>, vector<8x56xf32> -> vector<8x128xf32>
    %9 = vector.extract_strided_slice %8 {offsets = [0, 0], sizes = [8, 72], strides = [1, 1]} : vector<8x128xf32> to vector<8x72xf32>
    %10 = vector.shape_cast %9 : vector<8x72xf32> to vector<8x72x1xf32>
    %11 = vector.shape_cast %8 : vector<8x128xf32> to vector<8x1x128xf32>
    %12 = tpu.iota {dimensions = array<i32: 0>} : vector<72x128xi32>
    %13 = tpu.iota {dimensions = array<i32: 1>} : vector<72x128xi32>
    %14 = arith.cmpi sle, %12, %13 : vector<72x128xi32>
    %15 = vector.broadcast %10 : vector<8x72x1xf32> to vector<8x72x128xf32>
    %16 = vector.broadcast %11 : vector<8x1x128xf32> to vector<8x72x128xf32>
    %17 = arith.cmpf ogt, %15, %16 : vector<8x72x128xf32>
    %18 = vector.broadcast %10 : vector<8x72x1xf32> to vector<8x72x128xf32>
    %19 = vector.broadcast %11 : vector<8x1x128xf32> to vector<8x72x128xf32>
    %20 = arith.cmpf oeq, %18, %19 : vector<8x72x128xf32>
    %21 = vector.shape_cast %14 : vector<72x128xi1> to vector<1x72x128xi1>
    %22 = vector.broadcast %21 : vector<1x72x128xi1> to vector<8x72x128xi1>
    %23 = arith.andi %20, %22 : vector<8x72x128xi1>
    %24 = arith.ori %17, %23 : vector<8x72x128xi1>
    %cst_6 = arith.constant 1.000000e+00 : f32
    %cst_7 = arith.constant 0.000000e+00 : f32
    %25 = vector.broadcast %cst_6 : f32 to vector<8x72x128xf32>
    %26 = vector.broadcast %cst_7 : f32 to vector<8x72x128xf32>
    %27 = arith.select %24, %25, %26 : vector<8x72x128xi1>, vector<8x72x128xf32>
    %28 = arith.truncf %27 : vector<8x72x128xf32> to vector<8x72x128xbf16>
    %29 = arith.truncf %2 : vector<2x72xf32> to vector<2x72xbf16>
    %30 = vector.shape_cast %29 : vector<2x72xbf16> to vector<1x2x72xbf16>
    %31 = vector.shape_cast %30 : vector<1x2x72xbf16> to vector<1x2x72xbf16>
    %32 = vector.broadcast %31 : vector<1x2x72xbf16> to vector<8x2x72xbf16>
    "tpu.trace_start"() <{level = 10 : i32, message = "bcm,bmj->bcj"}> : () -> ()
    %cst_8 = arith.constant dense<0.000000e+00> : vector<8x2x128xf32>
    %33 = tpu.matmul %32, %28, %cst_8 {dimension_numbers = #tpu.dot_dimension_numbers<[2], [1], [1], [2], [0, 0, 0, 1, 1, 2], [0], [0]>} : vector<8x2x72xbf16>, vector<8x72x128xbf16>, vector<8x2x128xf32> -> vector<8x2x128xf32>
    "tpu.trace_stop"() : () -> ()
    %34 = vector.extract_strided_slice %33 {offsets = [0, 0, 0], sizes = [8, 1, 128], strides = [1, 1, 1]} : vector<8x2x128xf32> to vector<8x1x128xf32>
    %cst_9 = arith.constant 1.000000e+00 : f32
    %35 = vector.broadcast %cst_9 : f32 to vector<8x1x128xf32>
    %36 = arith.subf %34, %35 : vector<8x1x128xf32>
    %37 = vector.extract_strided_slice %33 {offsets = [0, 1, 0], sizes = [8, 1, 128], strides = [1, 1, 1]} : vector<8x2x128xf32> to vector<8x1x128xf32>
    %c0_10 = arith.constant 0 : index
    %c0_11 = arith.constant 0 : index
    %38 = memref.load %arg4[%c0_10, %c0_11] : memref<1x1xf32, #tpu.memory_space<smem>>
    %39 = tpu.iota {dimensions = array<i32: 2>} : vector<1x1x128xi32>
    %c72_i32 = arith.constant 72 : i32
    %40 = vector.broadcast %c72_i32 : i32 to vector<1x1x128xi32>
    %41 = arith.cmpi slt, %39, %40 : vector<1x1x128xi32>
    %42 = vector.broadcast %38 : f32 to vector<8x1x128xf32>
    %43 = arith.cmpf ole, %37, %42 : vector<8x1x128xf32>
    %44 = vector.broadcast %41 : vector<1x1x128xi1> to vector<8x1x128xi1>
    %45 = arith.andi %44, %43 : vector<8x1x128xi1>
    %cst_12 = arith.constant 1.000000e+00 : f32
    %cst_13 = arith.constant 0.000000e+00 : f32
    %46 = vector.broadcast %cst_12 : f32 to vector<8x1x128xf32>
    %47 = vector.broadcast %cst_13 : f32 to vector<8x1x128xf32>
    %48 = arith.select %45, %46, %47 : vector<8x1x128xi1>, vector<8x1x128xf32>
    %cst_14 = arith.constant dense<0.000000e+00> : vector<8x1xf32>
    %49 = vector.multi_reduction <add>, %48, %cst_14 [2] : vector<8x1x128xf32> to vector<8x1xf32>
    %50 = vector.shape_cast %49 : vector<8x1xf32> to vector<8x1x1xf32>
    %cst_15 = arith.constant 1.000000e+00 : f32
    %51 = vector.broadcast %cst_15 : f32 to vector<8x1x1xf32>
    %52 = arith.subf %50, %51 : vector<8x1x1xf32>
    %cst_16 = arith.constant 0.000000e+00 : f32
    %cst_17 = arith.constant 7.100000e+01 : f32
    %53 = vector.broadcast %cst_16 : f32 to vector<8x1x1xf32>
    %54 = arith.maximumf %53, %52 : vector<8x1x1xf32>
    %55 = vector.broadcast %cst_17 : f32 to vector<8x1x1xf32>
    %56 = arith.minimumf %55, %54 : vector<8x1x1xf32>
    %57 = vector.broadcast %56 : vector<8x1x1xf32> to vector<8x1x128xf32>
    %58 = arith.cmpf oeq, %36, %57 : vector<8x1x128xf32>
    %59 = vector.broadcast %41 : vector<1x1x128xi1> to vector<8x1x128xi1>
    %60 = arith.andi %59, %58 : vector<8x1x128xi1>
    %cst_18 = arith.constant 0.000000e+00 : f32
    %61 = vector.broadcast %cst_18 : f32 to vector<8x1x128xf32>
    %62 = arith.select %60, %11, %61 : vector<8x1x128xi1>, vector<8x1x128xf32>
    %cst_19 = arith.constant dense<0.000000e+00> : vector<8x1xf32>
    %63 = vector.multi_reduction <add>, %62, %cst_19 [2] : vector<8x1x128xf32> to vector<8x1xf32>
    %64 = vector.shape_cast %63 : vector<8x1xf32> to vector<8x1x1xf32>
    %65 = vector.shape_cast %64 : vector<8x1x1xf32> to vector<8x1xf32>
    %66 = vector.shape_cast %65 : vector<8x1xf32> to vector<8x1xf32>
    %67 = vector.broadcast %66 : vector<8x1xf32> to vector<8x128xf32>
    %c0_20 = arith.constant 0 : index
    %c0_21 = arith.constant 0 : index
    %68 = vector.load %arg5[%c0_20, %c0_21] : memref<8x128xf32, #tpu.memory_space<vmem>>, vector<8x128xf32>
    tpu.vector_store %arg5[%c0_20, %c0_21], %67 {strides = array<i32>} : memref<8x128xf32, #tpu.memory_space<vmem>>, vector<8x128xf32>,
    return
  }
  func.func @transform_0(%arg0: i32) -> (i32, i32) {
    %c0_i32 = arith.constant 0 : i32
    %c0_i32_0 = arith.constant 0 : i32
    return %arg0, %c0_i32 : i32, i32
  }
  func.func @transform_1(%arg0: i32) -> (i32, i32) {
    %c0_i32 = arith.constant 0 : i32
    %c0_i32_0 = arith.constant 0 : i32
    %c0_i32_1 = arith.constant 0 : i32
    return %c0_i32, %c0_i32_0 : i32, i32
  }
  func.func @transform_2(%arg0: i32) -> (i32, i32) {
    %c0_i32 = arith.constant 0 : i32
    %c0_i32_0 = arith.constant 0 : i32
    %c0_i32_1 = arith.constant 0 : i32
    return %c0_i32, %c0_i32_0 : i32, i32
  }
  func.func @transform_3(%arg0: i32) -> (i32, i32) {
    %c0_i32 = arith.constant 0 : i32
    %c0_i32_0 = arith.constant 0 : i32
    %c0_i32_1 = arith.constant 0 : i32
    return %c0_i32, %c0_i32_0 : i32, i32
  }
  func.func @transform_4(%arg0: i32) -> (i32, i32) {
    %c0_i32 = arith.constant 0 : i32
    %c0_i32_0 = arith.constant 0 : i32
    return %arg0, %c0_i32 : i32, i32
  }
}

</mosaic_0001>

<llo_original>
// kernel: tpu_custom_call.1
$region0: #{tpu_custom_call.1}
  #allocation0 [shape = 'u32[]', space=smem, size = 0x4, offset = 0x4, fixed_abs, tag = 'smem constant byte address 0x4 - core index']
  #allocation1 [shape = 'u32[144,128]{1,0:T(1,128)}', space=vmem, size = 0x12000, scoped, tag = 'internal scratch']
  #allocation2 [shape = 'f32[1,1]{1,0:T(1,128)S(6)}', space=smem, size = 0x200, scoped, tag = 'scoped memory for tpu_custom_call.1']
  %s0 = inlined_call_operand.hbm [shape: f32[8,36], index: 0, kind: input, shape index: {}]
  %s1 = inlined_call_operand.vmem [shape: f32[1,36], index: 1, kind: input, shape index: {}]
  %s2 = inlined_call_operand.vmem [shape: f32[2,72], index: 2, kind: input, shape index: {}]
  %s3 = inlined_call_operand.<no memory space> [shape: f32[1,1], index: 3, kind: input, shape index: {}]
  %s4 = inlined_call_operand.hbm [shape: f32[8,128], index: 4, kind: output, shape index: {}]
  %s5 = sld [smem:[#allocation0]]
  $region30: #{tpu_custom_call.1} parent=0
    _
  %s7 = ssub.s32 1, %s5
  %s8 = scalar_select 0, %s7, %s5
  %9 = sst [smem:[#allocation2]] %s3
  $region1: #{tpu_custom_call.1} parent=0
    #allocation3 [shape = 'u8[4096]{0}', space=vmem, size = 0x1000, scoped, tag = 'input window, operand 0, single buffered']
    #allocation4 [shape = 's32[1]{0}', space=sflag, size = 0x4, scoped, tag = 'scoped memory for tpu_custom_call.1']
    #allocation5 [shape = 's32[1]{0}', space=sflag, size = 0x4, scoped, tag = 'scoped memory for tpu_custom_call.1']
    #allocation6 [shape = 'u8[4096]{0}', space=vmem, size = 0x1000, scoped, tag = 'output window, operand 0, single buffered']
    %10 = vsyncpa [#allocation4], 0
    %11 = vsyncpa [#allocation5], 0
    // Predicated region
    $region2: #{tpu_custom_call.1} parent=1 // pred_check
      _
    $region3: #{tpu_custom_call.1} parent=1 // pred_check_branch
      %13 = sbr.rel (0) target = $region5
    $region4: #{tpu_custom_call.1} parent=1 // pred_region
      %s15 = ssub.s32 128, 128
      %16 = vsyncadd [#allocation4], %s15
      %s18 = sshll.u32 [#allocation3], 4
      %s19 = int_to_ptr.vmem [resolvable:$true] %s18
      %21 = dma.hbm_to_vmem [thread:$0]  %s0, 128, %s19, [#allocation4]
    $region5: #{tpu_custom_call.1} parent=1 // pred_fallthru
      _
    // Predicated region
    $region6: #{tpu_custom_call.1} parent=1 // pred_check
      _
    $region7: #{tpu_custom_call.1} parent=1 // pred_check_branch
      %23 = sbr.rel (0) target = $region9
    $region8: #{tpu_custom_call.1} parent=1 // pred_region
      _
    $region9: #{tpu_custom_call.1} parent=1 // pred_fallthru
      _
    // Predicated region
    $region10: #{tpu_custom_call.1} parent=1 // pred_check
      _
    $region11: #{tpu_custom_call.1} parent=1 // pred_check_branch
      %25 = sbr.rel (0) target = $region13
    $region12: #{tpu_custom_call.1} parent=1 // pred_region
      _
    $region13: #{tpu_custom_call.1} parent=1 // pred_fallthru
      _
    // Predicated region
    $region14: #{tpu_custom_call.1} parent=1 // pred_check
      _
    $region15: #{tpu_custom_call.1} parent=1 // pred_check_branch
      %27 = sbr.rel (0) target = $region17
    $region16: #{tpu_custom_call.1} parent=1 // pred_region
      _
    $region17: #{tpu_custom_call.1} parent=1 // pred_fallthru
      _
    // Predicated region
    $region18: #{tpu_custom_call.1} parent=1 // pred_check
      _
    $region19: #{tpu_custom_call.1} parent=1 // pred_check_branch
      %29 = sbr.rel (0) target = $region21
    $region20: #{tpu_custom_call.1} parent=1 // pred_region
      %30 = dma.done [#allocation4], 128
    $region21: #{tpu_custom_call.1} parent=1 // pred_fallthru
      _
    %v32 = vld [vmem:[#allocation3] sm:$0xff]
    %v33 = vld [vmem:[%s1] sm:$0x1]
    %v34 = vld [vmem:[%s2] sm:$0x3]
    %v36 = vlaneseq
    %v37 = vshrl.u32 %v36, 7
    %v38 = vsub.s32 0, %v37
    %v39 = vrot.slane %v33, %v38
    %v41 = vadd.f32 %v32, %v39
    %v42 = vsub.f32 0.0, %v41
    %44 = vrot.lane.b32.xlu0 %v42, 36
    %v45 = vpop.permute.xlu0 %44
    %vm47 = vcmask 293888
    %v48 = vsel %vm47, %v41, %v45
    %vm49 = vcmask 588800
    %v50 = vsel %vm49, %v48, -3.4028235e+38
    %v51 = vlaneseq
    %v52 = vshrl.u32 %v51, 7
    %v53 = vsub.s32 0, %v52
    %v54 = vrot.slane %v50, %v53
    %56 = vbcast.lane.b32.xlu0 %v54, 256
    %v57 = vpop.permute.xlu0 %56
    %s59 = sor.u32 256, 8
    %60 = vbcast.lane.b32.xlu0 %v54, %s59
    %v61 = vpop.permute.xlu0 %60
    %s63 = sor.u32 256, 16
    %64 = vbcast.lane.b32.xlu0 %v54, %s63
    %v65 = vpop.permute.xlu0 %64
    %s67 = sor.u32 256, 24
    %68 = vbcast.lane.b32.xlu0 %v54, %s67
    %v69 = vpop.permute.xlu0 %68
    %s71 = sor.u32 256, 32
    %72 = vbcast.lane.b32.xlu0 %v54, %s71
    %v73 = vpop.permute.xlu0 %72
    %s75 = sor.u32 256, 40
    %76 = vbcast.lane.b32.xlu0 %v54, %s75
    %v77 = vpop.permute.xlu0 %76
    %s79 = sor.u32 256, 48
    %80 = vbcast.lane.b32.xlu0 %v54, %s79
    %v81 = vpop.permute.xlu0 %80
    %s83 = sor.u32 256, 56
    %84 = vbcast.lane.b32.xlu0 %v54, %s83
    %v85 = vpop.permute.xlu0 %84
    %s87 = sor.u32 256, 64
    %88 = vbcast.lane.b32.xlu0 %v54, %s87
    %v89 = vpop.permute.xlu0 %88
    %v90 = vlaneseq
    %v91 = vshrl.u32 %v90, 7
    %v92 = vsub.s32 1, %v91
    %v93 = vrot.slane %v50, %v92
    %95 = vbcast.lane.b32.xlu0 %v93, 256
    %v96 = vpop.permute.xlu0 %95
    %s98 = sor.u32 256, 8
    %99 = vbcast.lane.b32.xlu0 %v93, %s98
    %v100 = vpop.permute.xlu0 %99
    %s102 = sor.u32 256, 16
    %103 = vbcast.lane.b32.xlu0 %v93, %s102
    %v104 = vpop.permute.xlu0 %103
    %s106 = sor.u32 256, 24
    %107 = vbcast.lane.b32.xlu0 %v93, %s106
    %v108 = vpop.permute.xlu0 %107
    %s110 = sor.u32 256, 32
    %111 = vbcast.lane.b32.xlu0 %v93, %s110
    %v112 = vpop.permute.xlu0 %111
    %s114 = sor.u32 256, 40
    %115 = vbcast.lane.b32.xlu0 %v93, %s114
    %v116 = vpop.permute.xlu0 %115
    %s118 = sor.u32 256, 48
    %119 = vbcast.lane.b32.xlu0 %v93, %s118
    %v120 = vpop.permute.xlu0 %119
    %s122 = sor.u32 256, 56
    %123 = vbcast.lane.b32.xlu0 %v93, %s122
    %v124 = vpop.permute.xlu0 %123
    %s126 = sor.u32 256, 64
    %127 = vbcast.lane.b32.xlu0 %v93, %s126
    %v128 = vpop.permute.xlu0 %127
    %v129 = vlaneseq
    %v130 = vshrl.u32 %v129, 7
    %v131 = vsub.s32 2, %v130
    %v132 = vrot.slane %v50, %v131
    %134 = vbcast.lane.b32.xlu0 %v132, 256
    %v135 = vpop.permute.xlu0 %134
    %s137 = sor.u32 256, 8
    %138 = vbcast.lane.b32.xlu0 %v132, %s137
    %v139 = vpop.permute.xlu0 %138
    %s141 = sor.u32 256, 16
    %142 = vbcast.lane.b32.xlu0 %v132, %s141
    %v143 = vpop.permute.xlu0 %142
    %s145 = sor.u32 256, 24
    %146 = vbcast.lane.b32.xlu0 %v132, %s145
    %v147 = vpop.permute.xlu0 %146
    %s149 = sor.u32 256, 32
    %150 = vbcast.lane.b32.xlu0 %v132, %s149
    %v151 = vpop.permute.xlu0 %150
    %s153 = sor.u32 256, 40
    %154 = vbcast.lane.b32.xlu0 %v132, %s153
    %v155 = vpop.permute.xlu0 %154
    %s157 = sor.u32 256, 48
    %158 = vbcast.lane.b32.xlu0 %v132, %s157
    %v159 = vpop.permute.xlu0 %158
    %s161 = sor.u32 256, 56
    %162 = vbcast.lane.b32.xlu0 %v132, %s161
    %v163 = vpop.permute.xlu0 %162
    %s165 = sor.u32 256, 64
    %166 = vbcast.lane.b32.xlu0 %v132, %s165
    %v167 = vpop.permute.xlu0 %166
    %v168 = vlaneseq
    %v169 = vshrl.u32 %v168, 7
    %v170 = vsub.s32 3, %v169
    %v171 = vrot.slane %v50, %v170
    %173 = vbcast.lane.b32.xlu0 %v171, 256
    %v174 = vpop.permute.xlu0 %173
    %s176 = sor.u32 256, 8
    %177 = vbcast.lane.b32.xlu0 %v171, %s176
    %v178 = vpop.permute.xlu0 %177
    %s180 = sor.u32 256, 16
    %181 = vbcast.lane.b32.xlu0 %v171, %s180
    %v182 = vpop.permute.xlu0 %181
    %s184 = sor.u32 256, 24
    %185 = vbcast.lane.b32.xlu0 %v171, %s184
    %v186 = vpop.permute.xlu0 %185
    %s188 = sor.u32 256, 32
    %189 = vbcast.lane.b32.xlu0 %v171, %s188
    %v190 = vpop.permute.xlu0 %189
    %s192 = sor.u32 256, 40
    %193 = vbcast.lane.b32.xlu0 %v171, %s192
    %v194 = vpop.permute.xlu0 %193
    %s196 = sor.u32 256, 48
    %197 = vbcast.lane.b32.xlu0 %v171, %s196
    %v198 = vpop.permute.xlu0 %197
    %s200 = sor.u32 256, 56
    %201 = vbcast.lane.b32.xlu0 %v171, %s200
    %v202 = vpop.permute.xlu0 %201
    %s204 = sor.u32 256, 64
    %205 = vbcast.lane.b32.xlu0 %v171, %s204
    %v206 = vpop.permute.xlu0 %205
    %v207 = vlaneseq
    %v208 = vshrl.u32 %v207, 7
    %v209 = vsub.s32 4, %v208
    %v210 = vrot.slane %v50, %v209
    %212 = vbcast.lane.b32.xlu0 %v210, 256
    %v213 = vpop.permute.xlu0 %212
    %s215 = sor.u32 256, 8
    %216 = vbcast.lane.b32.xlu0 %v210, %s215
    %v217 = vpop.permute.xlu0 %216
    %s219 = sor.u32 256, 16
    %220 = vbcast.lane.b32.xlu0 %v210, %s219
    %v221 = vpop.permute.xlu0 %220
    %s223 = sor.u32 256, 24
    %224 = vbcast.lane.b32.xlu0 %v210, %s223
    %v225 = vpop.permute.xlu0 %224
    %s227 = sor.u32 256, 32
    %228 = vbcast.lane.b32.xlu0 %v210, %s227
    %v229 = vpop.permute.xlu0 %228
    %s231 = sor.u32 256, 40
    %232 = vbcast.lane.b32.xlu0 %v210, %s231
    %v233 = vpop.permute.xlu0 %232
    %s235 = sor.u32 256, 48
    %236 = vbcast.lane.b32.xlu0 %v210, %s235
    %v237 = vpop.permute.xlu0 %236
    %s239 = sor.u32 256, 56
    %240 = vbcast.lane.b32.xlu0 %v210, %s239
    %v241 = vpop.permute.xlu0 %240
    %s243 = sor.u32 256, 64
    %244 = vbcast.lane.b32.xlu0 %v210, %s243
    %v245 = vpop.permute.xlu0 %244
    %v246 = vlaneseq
    %v247 = vshrl.u32 %v246, 7
    %v248 = vsub.s32 5, %v247
    %v249 = vrot.slane %v50, %v248
    %251 = vbcast.lane.b32.xlu0 %v249, 256
    %v252 = vpop.permute.xlu0 %251
    %s254 = sor.u32 256, 8
    %255 = vbcast.lane.b32.xlu0 %v249, %s254
    %v256 = vpop.permute.xlu0 %255
    %s258 = sor.u32 256, 16
    %259 = vbcast.lane.b32.xlu0 %v249, %s258
    %v260 = vpop.permute.xlu0 %259
    %s262 = sor.u32 256, 24
    %263 = vbcast.lane.b32.xlu0 %v249, %s262
    %v264 = vpop.permute.xlu0 %263
    %s266 = sor.u32 256, 32
    %267 = vbcast.lane.b32.xlu0 %v249, %s266
    %v268 = vpop.permute.xlu0 %267
    %s270 = sor.u32 256, 40
    %271 = vbcast.lane.b32.xlu0 %v249, %s270
    %v272 = vpop.permute.xlu0 %271
    %s274 = sor.u32 256, 48
    %275 = vbcast.lane.b32.xlu0 %v249, %s274
    %v276 = vpop.permute.xlu0 %275
    %s278 = sor.u32 256, 56
    %279 = vbcast.lane.b32.xlu0 %v249, %s278
    %v280 = vpop.permute.xlu0 %279
    %s282 = sor.u32 256, 64
    %283 = vbcast.lane.b32.xlu0 %v249, %s282
    %v284 = vpop.permute.xlu0 %283
    %v285 = vlaneseq
    %v286 = vshrl.u32 %v285, 7
    %v287 = vsub.s32 6, %v286
    %v288 = vrot.slane %v50, %v287
    %290 = vbcast.lane.b32.xlu0 %v288, 256
    %v291 = vpop.permute.xlu0 %290
    %s293 = sor.u32 256, 8
    %294 = vbcast.lane.b32.xlu0 %v288, %s293
    %v295 = vpop.permute.xlu0 %294
    %s297 = sor.u32 256, 16
    %298 = vbcast.lane.b32.xlu0 %v288, %s297
    %v299 = vpop.permute.xlu0 %298
    %s301 = sor.u32 256, 24
    %302 = vbcast.lane.b32.xlu0 %v288, %s301
    %v303 = vpop.permute.xlu0 %302
    %s305 = sor.u32 256, 32
    %306 = vbcast.lane.b32.xlu0 %v288, %s305
    %v307 = vpop.permute.xlu0 %306
    %s309 = sor.u32 256, 40
    %310 = vbcast.lane.b32.xlu0 %v288, %s309
    %v311 = vpop.permute.xlu0 %310
    %s313 = sor.u32 256, 48
    %314 = vbcast.lane.b32.xlu0 %v288, %s313
    %v315 = vpop.permute.xlu0 %314
    %s317 = sor.u32 256, 56
    %318 = vbcast.lane.b32.xlu0 %v288, %s317
    %v319 = vpop.permute.xlu0 %318
    %s321 = sor.u32 256, 64
    %322 = vbcast.lane.b32.xlu0 %v288, %s321
    %v323 = vpop.permute.xlu0 %322
    %v324 = vlaneseq
    %v325 = vshrl.u32 %v324, 7
    %v326 = vsub.s32 7, %v325
    %v327 = vrot.slane %v50, %v326
    %329 = vbcast.lane.b32.xlu0 %v327, 256
    %v330 = vpop.permute.xlu0 %329
    %s332 = sor.u32 256, 8
    %333 = vbcast.lane.b32.xlu0 %v327, %s332
    %v334 = vpop.permute.xlu0 %333
    %s336 = sor.u32 256, 16
    %337 = vbcast.lane.b32.xlu0 %v327, %s336
    %v338 = vpop.permute.xlu0 %337
    %s340 = sor.u32 256, 24
    %341 = vbcast.lane.b32.xlu0 %v327, %s340
    %v342 = vpop.permute.xlu0 %341
    %s344 = sor.u32 256, 32
    %345 = vbcast.lane.b32.xlu0 %v327, %s344
    %v346 = vpop.permute.xlu0 %345
    %s348 = sor.u32 256, 40
    %349 = vbcast.lane.b32.xlu0 %v327, %s348
    %v350 = vpop.permute.xlu0 %349
    %s352 = sor.u32 256, 48
    %353 = vbcast.lane.b32.xlu0 %v327, %s352
    %v354 = vpop.permute.xlu0 %353
    %s356 = sor.u32 256, 56
    %357 = vbcast.lane.b32.xlu0 %v327, %s356
    %v358 = vpop.permute.xlu0 %357
    %s360 = sor.u32 256, 64
    %361 = vbcast.lane.b32.xlu0 %v327, %s360
    %v362 = vpop.permute.xlu0 %361
    %v364 = vcombine.high %v50, %v50
    %v366 = vunpack.c.l.s4 1966171168
    %v367 = vunpack.c.0.s8 %v366
    %v368 = vlaneseq
    %v369 = vshrl.u32 %v368, 7
    %v370 = vsub.s32 %v367, %v369
    %v371 = vrot.slane %v50, %v370
    %v373 = vunpack.c.l.s4 1966171168
    %v374 = vunpack.c.0.s8 %v373
    %v375 = vlaneseq
    %v376 = vshrl.u32 %v375, 7
    %v377 = vsub.s32 %v374, %v376
    %v378 = vrot.slane %v364, %v377
    %v379 = vcombine.high %v371, %v371
    %v380 = vcombine.high %v378, %v378
    %v382 = vunpack.c.l.s4 1966171168
    %v383 = vunpack.c.0.s8 %v382
    %v384 = vlaneseq
    %v385 = vshrl.u32 %v384, 7
    %v386 = vsub.s32 %v383, %v385
    %v387 = vrot.slane %v371, %v386
    %v389 = vunpack.c.l.s4 1966171168
    %v390 = vunpack.c.0.s8 %v389
    %v391 = vlaneseq
    %v392 = vshrl.u32 %v391, 7
    %v393 = vsub.s32 %v390, %v392
    %v394 = vrot.slane %v378, %v393
    %v396 = vunpack.c.l.s4 1966171168
    %v397 = vunpack.c.0.s8 %v396
    %v398 = vlaneseq
    %v399 = vshrl.u32 %v398, 7
    %v400 = vsub.s32 %v397, %v399
    %v401 = vrot.slane %v379, %v400
    %v403 = vunpack.c.l.s4 1966171168
    %v404 = vunpack.c.0.s8 %v403
    %v405 = vlaneseq
    %v406 = vshrl.u32 %v405, 7
    %v407 = vsub.s32 %v404, %v406
    %v408 = vrot.slane %v380, %v407
    %v409 = vcombine.high %v387, %v387
    %v410 = vcombine.high %v394, %v394
    %v411 = vcombine.high %v401, %v401
    %v412 = vcombine.high %v408, %v408
    %v421 = vlaneseq
    %v422 = vshrl.u32 %v421, 7
    %v423 = vadd.s32 %v422, 8
    %v424 = vadd.s32 %v422, 16
    %v425 = vadd.s32 %v422, 24
    %v426 = vadd.s32 %v422, 32
    %v427 = vadd.s32 %v422, 40
    %v428 = vadd.s32 %v422, 48
    %v429 = vadd.s32 %v422, 56
    %v430 = vadd.s32 %v422, 64
    %v431 = vlaneseq
    %v432 = vand.u32 %v431, 127
    %vm433 = vcmp.le.s32.totalorder %v422, %v432
    %vm434 = vcmp.le.s32.totalorder %v423, %v432
    %vm435 = vcmp.le.s32.totalorder %v424, %v432
    %vm436 = vcmp.le.s32.totalorder %v425, %v432
    %vm437 = vcmp.le.s32.totalorder %v426, %v432
    %vm438 = vcmp.le.s32.totalorder %v427, %v432
    %vm439 = vcmp.le.s32.totalorder %v428, %v432
    %vm440 = vcmp.le.s32.totalorder %v429, %v432
    %vm441 = vcmp.le.s32.totalorder %v430, %v432
    %v442 = vlaneseq
    %v443 = vshrl.u32 %v442, 7
    %v444 = vsub.s32 0, %v443
    %v445 = vrot.slane %v387, %v444
    %v446 = vlaneseq
    %v447 = vshrl.u32 %v446, 7
    %v448 = vsub.s32 0, %v447
    %v449 = vrot.slane %v401, %v448
    %v450 = vlaneseq
    %v451 = vshrl.u32 %v450, 7
    %v452 = vsub.s32 0, %v451
    %v453 = vrot.slane %v409, %v452
    %v454 = vlaneseq
    %v455 = vshrl.u32 %v454, 7
    %v456 = vsub.s32 0, %v455
    %v457 = vrot.slane %v411, %v456
    %v458 = vlaneseq
    %v459 = vshrl.u32 %v458, 7
    %v460 = vsub.s32 0, %v459
    %v461 = vrot.slane %v394, %v460
    %v462 = vlaneseq
    %v463 = vshrl.u32 %v462, 7
    %v464 = vsub.s32 0, %v463
    %v465 = vrot.slane %v408, %v464
    %v466 = vlaneseq
    %v467 = vshrl.u32 %v466, 7
    %v468 = vsub.s32 0, %v467
    %v469 = vrot.slane %v410, %v468
    %v470 = vlaneseq
    %v471 = vshrl.u32 %v470, 7
    %v472 = vsub.s32 0, %v471
    %v473 = vrot.slane %v412, %v472
    %vm482 = vcmp.gt.f32.partialorder %v57, %v445
    %vm483 = vcmp.gt.f32.partialorder %v61, %v445
    %vm484 = vcmp.gt.f32.partialorder %v65, %v445
    %vm485 = vcmp.gt.f32.partialorder %v69, %v445
    %vm486 = vcmp.gt.f32.partialorder %v73, %v445
    %vm487 = vcmp.gt.f32.partialorder %v77, %v445
    %vm488 = vcmp.gt.f32.partialorder %v81, %v445
    %vm489 = vcmp.gt.f32.partialorder %v85, %v445
    %vm490 = vcmp.gt.f32.partialorder %v89, %v445
    %vm491 = vcmp.gt.f32.partialorder %v96, %v449
    %vm492 = vcmp.gt.f32.partialorder %v100, %v449
    %vm493 = vcmp.gt.f32.partialorder %v104, %v449
    %vm494 = vcmp.gt.f32.partialorder %v108, %v449
    %vm495 = vcmp.gt.f32.partialorder %v112, %v449
    %vm496 = vcmp.gt.f32.partialorder %v116, %v449
    %vm497 = vcmp.gt.f32.partialorder %v120, %v449
    %vm498 = vcmp.gt.f32.partialorder %v124, %v449
    %vm499 = vcmp.gt.f32.partialorder %v128, %v449
    %vm500 = vcmp.gt.f32.partialorder %v135, %v453
    %vm501 = vcmp.gt.f32.partialorder %v139, %v453
    %vm502 = vcmp.gt.f32.partialorder %v143, %v453
    %vm503 = vcmp.gt.f32.partialorder %v147, %v453
    %vm504 = vcmp.gt.f32.partialorder %v151, %v453
    %vm505 = vcmp.gt.f32.partialorder %v155, %v453
    %vm506 = vcmp.gt.f32.partialorder %v159, %v453
    %vm507 = vcmp.gt.f32.partialorder %v163, %v453
    %vm508 = vcmp.gt.f32.partialorder %v167, %v453
    %vm509 = vcmp.gt.f32.partialorder %v174, %v457
    %vm510 = vcmp.gt.f32.partialorder %v178, %v457
    %vm511 = vcmp.gt.f32.partialorder %v182, %v457
    %vm512 = vcmp.gt.f32.partialorder %v186, %v457
    %vm513 = vcmp.gt.f32.partialorder %v190, %v457
    %vm514 = vcmp.gt.f32.partialorder %v194, %v457
    %vm515 = vcmp.gt.f32.partialorder %v198, %v457
    %vm516 = vcmp.gt.f32.partialorder %v202, %v457
    %vm517 = vcmp.gt.f32.partialorder %v206, %v457
    %vm518 = vcmp.gt.f32.partialorder %v213, %v461
    %vm519 = vcmp.gt.f32.partialorder %v217, %v461
    %vm520 = vcmp.gt.f32.partialorder %v221, %v461
    %vm521 = vcmp.gt.f32.partialorder %v225, %v461
    %vm522 = vcmp.gt.f32.partialorder %v229, %v461
    %vm523 = vcmp.gt.f32.partialorder %v233, %v461
    %vm524 = vcmp.gt.f32.partialorder %v237, %v461
    %vm525 = vcmp.gt.f32.partialorder %v241, %v461
    %vm526 = vcmp.gt.f32.partialorder %v245, %v461
    %vm527 = vcmp.gt.f32.partialorder %v252, %v465
    %vm528 = vcmp.gt.f32.partialorder %v256, %v465
    %vm529 = vcmp.gt.f32.partialorder %v260, %v465
    %vm530 = vcmp.gt.f32.partialorder %v264, %v465
    %vm531 = vcmp.gt.f32.partialorder %v268, %v465
    %vm532 = vcmp.gt.f32.partialorder %v272, %v465
    %vm533 = vcmp.gt.f32.partialorder %v276, %v465
    %vm534 = vcmp.gt.f32.partialorder %v280, %v465
    %vm535 = vcmp.gt.f32.partialorder %v284, %v465
    %vm536 = vcmp.gt.f32.partialorder %v291, %v469
    %vm537 = vcmp.gt.f32.partialorder %v295, %v469
    %vm538 = vcmp.gt.f32.partialorder %v299, %v469
    %vm539 = vcmp.gt.f32.partialorder %v303, %v469
    %vm540 = vcmp.gt.f32.partialorder %v307, %v469
    %vm541 = vcmp.gt.f32.partialorder %v311, %v469
    %vm542 = vcmp.gt.f32.partialorder %v315, %v469
    %vm543 = vcmp.gt.f32.partialorder %v319, %v469
    %vm544 = vcmp.gt.f32.partialorder %v323, %v469
    %vm545 = vcmp.gt.f32.partialorder %v330, %v473
    %vm546 = vcmp.gt.f32.partialorder %v334, %v473
    %vm547 = vcmp.gt.f32.partialorder %v338, %v473
    %vm548 = vcmp.gt.f32.partialorder %v342, %v473
    %vm549 = vcmp.gt.f32.partialorder %v346, %v473
    %vm550 = vcmp.gt.f32.partialorder %v350, %v473
    %vm551 = vcmp.gt.f32.partialorder %v354, %v473
    %vm552 = vcmp.gt.f32.partialorder %v358, %v473
    %vm553 = vcmp.gt.f32.partialorder %v362, %v473
    %vm554 = vcmp.eq.f32.partialorder %v57, %v445
    %vm555 = vcmp.eq.f32.partialorder %v61, %v445
    %vm556 = vcmp.eq.f32.partialorder %v65, %v445
    %vm557 = vcmp.eq.f32.partialorder %v69, %v445
    %vm558 = vcmp.eq.f32.partialorder %v73, %v445
    %vm559 = vcmp.eq.f32.partialorder %v77, %v445
    %vm560 = vcmp.eq.f32.partialorder %v81, %v445
    %vm561 = vcmp.eq.f32.partialorder %v85, %v445
    %vm562 = vcmp.eq.f32.partialorder %v89, %v445
    %vm563 = vcmp.eq.f32.partialorder %v96, %v449
    %vm564 = vcmp.eq.f32.partialorder %v100, %v449
    %vm565 = vcmp.eq.f32.partialorder %v104, %v449
    %vm566 = vcmp.eq.f32.partialorder %v108, %v449
    %vm567 = vcmp.eq.f32.partialorder %v112, %v449
    %vm568 = vcmp.eq.f32.partialorder %v116, %v449
    %vm569 = vcmp.eq.f32.partialorder %v120, %v449
    %vm570 = vcmp.eq.f32.partialorder %v124, %v449
    %vm571 = vcmp.eq.f32.partialorder %v128, %v449
    %vm572 = vcmp.eq.f32.partialorder %v135, %v453
    %vm573 = vcmp.eq.f32.partialorder %v139, %v453
    %vm574 = vcmp.eq.f32.partialorder %v143, %v453
    %vm575 = vcmp.eq.f32.partialorder %v147, %v453
    %vm576 = vcmp.eq.f32.partialorder %v151, %v453
    %vm577 = vcmp.eq.f32.partialorder %v155, %v453
    %vm578 = vcmp.eq.f32.partialorder %v159, %v453
    %vm579 = vcmp.eq.f32.partialorder %v163, %v453
    %vm580 = vcmp.eq.f32.partialorder %v167, %v453
    %vm581 = vcmp.eq.f32.partialorder %v174, %v457
    %vm582 = vcmp.eq.f32.partialorder %v178, %v457
    %vm583 = vcmp.eq.f32.partialorder %v182, %v457
    %vm584 = vcmp.eq.f32.partialorder %v186, %v457
    %vm585 = vcmp.eq.f32.partialorder %v190, %v457
    %vm586 = vcmp.eq.f32.partialorder %v194, %v457
    %vm587 = vcmp.eq.f32.partialorder %v198, %v457
    %vm588 = vcmp.eq.f32.partialorder %v202, %v457
    %vm589 = vcmp.eq.f32.partialorder %v206, %v457
    %vm590 = vcmp.eq.f32.partialorder %v213, %v461
    %vm591 = vcmp.eq.f32.partialorder %v217, %v461
    %vm592 = vcmp.eq.f32.partialorder %v221, %v461
    %vm593 = vcmp.eq.f32.partialorder %v225, %v461
    %vm594 = vcmp.eq.f32.partialorder %v229, %v461
    %vm595 = vcmp.eq.f32.partialorder %v233, %v461
    %vm596 = vcmp.eq.f32.partialorder %v237, %v461
    %vm597 = vcmp.eq.f32.partialorder %v241, %v461
    %vm598 = vcmp.eq.f32.partialorder %v245, %v461
    %vm599 = vcmp.eq.f32.partialorder %v252, %v465
    %vm600 = vcmp.eq.f32.partialorder %v256, %v465
    %vm601 = vcmp.eq.f32.partialorder %v260, %v465
    %vm602 = vcmp.eq.f32.partialorder %v264, %v465
    %vm603 = vcmp.eq.f32.partialorder %v268, %v465
    %vm604 = vcmp.eq.f32.partialorder %v272, %v465
    %vm605 = vcmp.eq.f32.partialorder %v276, %v465
    %vm606 = vcmp.eq.f32.partialorder %v280, %v465
    %vm607 = vcmp.eq.f32.partialorder %v284, %v465
    %vm608 = vcmp.eq.f32.partialorder %v291, %v469
    %vm609 = vcmp.eq.f32.partialorder %v295, %v469
    %vm610 = vcmp.eq.f32.partialorder %v299, %v469
    %vm611 = vcmp.eq.f32.partialorder %v303, %v469
    %vm612 = vcmp.eq.f32.partialorder %v307, %v469
    %vm613 = vcmp.eq.f32.partialorder %v311, %v469
    %vm614 = vcmp.eq.f32.partialorder %v315, %v469
    %vm615 = vcmp.eq.f32.partialorder %v319, %v469
    %vm616 = vcmp.eq.f32.partialorder %v323, %v469
    %vm617 = vcmp.eq.f32.partialorder %v330, %v473
    %vm618 = vcmp.eq.f32.partialorder %v334, %v473
    %vm619 = vcmp.eq.f32.partialorder %v338, %v473
    %vm620 = vcmp.eq.f32.partialorder %v342, %v473
    %vm621 = vcmp.eq.f32.partialorder %v346, %v473
    %vm622 = vcmp.eq.f32.partialorder %v350, %v473
    %vm623 = vcmp.eq.f32.partialorder %v354, %v473
    %vm624 = vcmp.eq.f32.partialorder %v358, %v473
    %vm625 = vcmp.eq.f32.partialorder %v362, %v473
    %v626 = vsel %vm433, 1, 0
    %v627 = vsel %vm434, 1, 0
    %v628 = vsel %vm435, 1, 0
    %v629 = vsel %vm436, 1, 0
    %v630 = vsel %vm437, 1, 0
    %v631 = vsel %vm438, 1, 0
    %v632 = vsel %vm439, 1, 0
    %v633 = vsel %vm440, 1, 0
    %v634 = vsel %vm441, 1, 0
    %vm635 = vcmp.eq.s32.totalorder %v626, 1
    %vm636 = vcmp.eq.s32.totalorder %v627, 1
    %vm637 = vcmp.eq.s32.totalorder %v628, 1
    %vm638 = vcmp.eq.s32.totalorder %v629, 1
    %vm639 = vcmp.eq.s32.totalorder %v630, 1
    %vm640 = vcmp.eq.s32.totalorder %v631, 1
    %vm641 = vcmp.eq.s32.totalorder %v632, 1
    %vm642 = vcmp.eq.s32.totalorder %v633, 1
    %vm643 = vcmp.eq.s32.totalorder %v634, 1
    %vm644 = vmand %vm554, %vm635
    %vm645 = vmand %vm555, %vm636
    %vm646 = vmand %vm556, %vm637
    %vm647 = vmand %vm557, %vm638
    %vm648 = vmand %vm558, %vm639
    %vm649 = vmand %vm559, %vm640
    %vm650 = vmand %vm560, %vm641
    %vm651 = vmand %vm561, %vm642
    %vm652 = vmand %vm562, %vm643
    %vm653 = vmand %vm563, %vm635
    %vm654 = vmand %vm564, %vm636
    %vm655 = vmand %vm565, %vm637
    %vm656 = vmand %vm566, %vm638
    %vm657 = vmand %vm567, %vm639
    %vm658 = vmand %vm568, %vm640
    %vm659 = vmand %vm569, %vm641
    %vm660 = vmand %vm570, %vm642
    %vm661 = vmand %vm571, %vm643
    %vm662 = vmand %vm572, %vm635
    %vm663 = vmand %vm573, %vm636
    %vm664 = vmand %vm574, %vm637
    %vm665 = vmand %vm575, %vm638
    %vm666 = vmand %vm576, %vm639
    %vm667 = vmand %vm577, %vm640
    %vm668 = vmand %vm578, %vm641
    %vm669 = vmand %vm579, %vm642
    %vm670 = vmand %vm580, %vm643
    %vm671 = vmand %vm581, %vm635
    %vm672 = vmand %vm582, %vm636
    %vm673 = vmand %vm583, %vm637
    %vm674 = vmand %vm584, %vm638
    %vm675 = vmand %vm585, %vm639
    %vm676 = vmand %vm586, %vm640
    %vm677 = vmand %vm587, %vm641
    %vm678 = vmand %vm588, %vm642
    %vm679 = vmand %vm589, %vm643
    %vm680 = vmand %vm590, %vm635
    %vm681 = vmand %vm591, %vm636
    %vm682 = vmand %vm592, %vm637
    %vm683 = vmand %vm593, %vm638
    %vm684 = vmand %vm594, %vm639
    %vm685 = vmand %vm595, %vm640
    %vm686 = vmand %vm596, %vm641
    %vm687 = vmand %vm597, %vm642
    %vm688 = vmand %vm598, %vm643
    %vm689 = vmand %vm599, %vm635
    %vm690 = vmand %vm600, %vm636
    %vm691 = vmand %vm601, %vm637
    %vm692 = vmand %vm602, %vm638
    %vm693 = vmand %vm603, %vm639
    %vm694 = vmand %vm604, %vm640
    %vm695 = vmand %vm605, %vm641
    %vm696 = vmand %vm606, %vm642
    %vm697 = vmand %vm607, %vm643
    %vm698 = vmand %vm608, %vm635
    %vm699 = vmand %vm609, %vm636
    %vm700 = vmand %vm610, %vm637
    %vm701 = vmand %vm611, %vm638
    %vm702 = vmand %vm612, %vm639
    %vm703 = vmand %vm613, %vm640
    %vm704 = vmand %vm614, %vm641
    %vm705 = vmand %vm615, %vm642
    %vm706 = vmand %vm616, %vm643
    %vm707 = vmand %vm617, %vm635
    %vm708 = vmand %vm618, %vm636
    %vm709 = vmand %vm619, %vm637
    %vm710 = vmand %vm620, %vm638
    %vm711 = vmand %vm621, %vm639
    %vm712 = vmand %vm622, %vm640
    %vm713 = vmand %vm623, %vm641
    %vm714 = vmand %vm624, %vm642
    %vm715 = vmand %vm625, %vm643
    %vm716 = vmor %vm482, %vm644
    %vm717 = vmor %vm483, %vm645
    %vm718 = vmor %vm484, %vm646
    %vm719 = vmor %vm485, %vm647
    %vm720 = vmor %vm486, %vm648
    %vm721 = vmor %vm487, %vm649
    %vm722 = vmor %vm488, %vm650
    %vm723 = vmor %vm489, %vm651
    %vm724 = vmor %vm490, %vm652
    %vm725 = vmor %vm491, %vm653
    %vm726 = vmor %vm492, %vm654
    %vm727 = vmor %vm493, %vm655
    %vm728 = vmor %vm494, %vm656
    %vm729 = vmor %vm495, %vm657
    %vm730 = vmor %vm496, %vm658
    %vm731 = vmor %vm497, %vm659
    %vm732 = vmor %vm498, %vm660
    %vm733 = vmor %vm499, %vm661
    %vm734 = vmor %vm500, %vm662
    %vm735 = vmor %vm501, %vm663
    %vm736 = vmor %vm502, %vm664
    %vm737 = vmor %vm503, %vm665
    %vm738 = vmor %vm504, %vm666
    %vm739 = vmor %vm505, %vm667
    %vm740 = vmor %vm506, %vm668
    %vm741 = vmor %vm507, %vm669
    %vm742 = vmor %vm508, %vm670
    %vm743 = vmor %vm509, %vm671
    %vm744 = vmor %vm510, %vm672
    %vm745 = vmor %vm511, %vm673
    %vm746 = vmor %vm512, %vm674
    %vm747 = vmor %vm513, %vm675
    %vm748 = vmor %vm514, %vm676
    %vm749 = vmor %vm515, %vm677
    %vm750 = vmor %vm516, %vm678
    %vm751 = vmor %vm517, %vm679
    %vm752 = vmor %vm518, %vm680
    %vm753 = vmor %vm519, %vm681
    %vm754 = vmor %vm520, %vm682
    %vm755 = vmor %vm521, %vm683
    %vm756 = vmor %vm522, %vm684
    %vm757 = vmor %vm523, %vm685
    %vm758 = vmor %vm524, %vm686
    %vm759 = vmor %vm525, %vm687
    %vm760 = vmor %vm526, %vm688
    %vm761 = vmor %vm527, %vm689
    %vm762 = vmor %vm528, %vm690
    %vm763 = vmor %vm529, %vm691
    %vm764 = vmor %vm530, %vm692
    %vm765 = vmor %vm531, %vm693
    %vm766 = vmor %vm532, %vm694
    %vm767 = vmor %vm533, %vm695
    %vm768 = vmor %vm534, %vm696
    %vm769 = vmor %vm535, %vm697
    %vm770 = vmor %vm536, %vm698
    %vm771 = vmor %vm537, %vm699
    %vm772 = vmor %vm538, %vm700
    %vm773 = vmor %vm539, %vm701
    %vm774 = vmor %vm540, %vm702
    %vm775 = vmor %vm541, %vm703
    %vm776 = vmor %vm542, %vm704
    %vm777 = vmor %vm543, %vm705
    %vm778 = vmor %vm544, %vm706
    %vm779 = vmor %vm545, %vm707
    %vm780 = vmor %vm546, %vm708
    %vm781 = vmor %vm547, %vm709
    %vm782 = vmor %vm548, %vm710
    %vm783 = vmor %vm549, %vm711
    %vm784 = vmor %vm550, %vm712
    %vm785 = vmor %vm551, %vm713
    %vm786 = vmor %vm552, %vm714
    %vm787 = vmor %vm553, %vm715
    %v788 = vsel %vm716, 1.0, 0.0
    %v789 = vsel %vm717, 1.0, 0.0
    %v790 = vsel %vm718, 1.0, 0.0
    %v791 = vsel %vm719, 1.0, 0.0
    %v792 = vsel %vm720, 1.0, 0.0
    %v793 = vsel %vm721, 1.0, 0.0
    %v794 = vsel %vm722, 1.0, 0.0
    %v795 = vsel %vm723, 1.0, 0.0
    %v796 = vsel %vm724, 1.0, 0.0
    %v797 = vsel %vm725, 1.0, 0.0
    %v798 = vsel %vm726, 1.0, 0.0
    %v799 = vsel %vm727, 1.0, 0.0
    %v800 = vsel %vm728, 1.0, 0.0
    %v801 = vsel %vm729, 1.0, 0.0
    %v802 = vsel %vm730, 1.0, 0.0
    %v803 = vsel %vm731, 1.0, 0.0
    %v804 = vsel %vm732, 1.0, 0.0
    %v805 = vsel %vm733, 1.0, 0.0
    %v806 = vsel %vm734, 1.0, 0.0
    %v807 = vsel %vm735, 1.0, 0.0
    %v808 = vsel %vm736, 1.0, 0.0
    %v809 = vsel %vm737, 1.0, 0.0
    %v810 = vsel %vm738, 1.0, 0.0
    %v811 = vsel %vm739, 1.0, 0.0
    %v812 = vsel %vm740, 1.0, 0.0
    %v813 = vsel %vm741, 1.0, 0.0
    %v814 = vsel %vm742, 1.0, 0.0
    %v815 = vsel %vm743, 1.0, 0.0
    %v816 = vsel %vm744, 1.0, 0.0
    %v817 = vsel %vm745, 1.0, 0.0
    %v818 = vsel %vm746, 1.0, 0.0
    %v819 = vsel %vm747, 1.0, 0.0
    %v820 = vsel %vm748, 1.0, 0.0
    %v821 = vsel %vm749, 1.0, 0.0
    %v822 = vsel %vm750, 1.0, 0.0
    %v823 = vsel %vm751, 1.0, 0.0
    %v824 = vsel %vm752, 1.0, 0.0
    %v825 = vsel %vm753, 1.0, 0.0
    %v826 = vsel %vm754, 1.0, 0.0
    %v827 = vsel %vm755, 1.0, 0.0
    %v828 = vsel %vm756, 1.0, 0.0
    %v829 = vsel %vm757, 1.0, 0.0
    %v830 = vsel %vm758, 1.0, 0.0
    %v831 = vsel %vm759, 1.0, 0.0
    %v832 = vsel %vm760, 1.0, 0.0
    %v833 = vsel %vm761, 1.0, 0.0
    %v834 = vsel %vm762, 1.0, 0.0
    %v835 = vsel %vm763, 1.0, 0.0
    %v836 = vsel %vm764, 1.0, 0.0
    %v837 = vsel %vm765, 1.0, 0.0
    %v838 = vsel %vm766, 1.0, 0.0
    %v839 = vsel %vm767, 1.0, 0.0
    %v840 = vsel %vm768, 1.0, 0.0
    %v841 = vsel %vm769, 1.0, 0.0
    %v842 = vsel %vm770, 1.0, 0.0
    %v843 = vsel %vm771, 1.0, 0.0
    %v844 = vsel %vm772, 1.0, 0.0
    %v845 = vsel %vm773, 1.0, 0.0
    %v846 = vsel %vm774, 1.0, 0.0
    %v847 = vsel %vm775, 1.0, 0.0
    %v848 = vsel %vm776, 1.0, 0.0
    %v849 = vsel %vm777, 1.0, 0.0
    %v850 = vsel %vm778, 1.0, 0.0
    %v851 = vsel %vm779, 1.0, 0.0
    %v852 = vsel %vm780, 1.0, 0.0
    %v853 = vsel %vm781, 1.0, 0.0
    %v854 = vsel %vm782, 1.0, 0.0
    %v855 = vsel %vm783, 1.0, 0.0
    %v856 = vsel %vm784, 1.0, 0.0
    %v857 = vsel %vm785, 1.0, 0.0
    %v858 = vsel %vm786, 1.0, 0.0
    %v859 = vsel %vm787, 1.0, 0.0
    %v860 = vpack.c.bf16 %v789, %v788
    %v861 = vpack.c.bf16 %v791, %v790
    %v862 = vpack.c.bf16 %v793, %v792
    %v863 = vpack.c.bf16 %v795, %v794
    %v864 = vpack.c.bf16 %v796, %v796
    %v865 = vpack.c.bf16 %v798, %v797
    %v866 = vpack.c.bf16 %v800, %v799
    %v867 = vpack.c.bf16 %v802, %v801
    %v868 = vpack.c.bf16 %v804, %v803
    %v869 = vpack.c.bf16 %v805, %v805
    %v870 = vpack.c.bf16 %v807, %v806
    %v871 = vpack.c.bf16 %v809, %v808
    %v872 = vpack.c.bf16 %v811, %v810
    %v873 = vpack.c.bf16 %v813, %v812
    %v874 = vpack.c.bf16 %v814, %v814
    %v875 = vpack.c.bf16 %v816, %v815
    %v876 = vpack.c.bf16 %v818, %v817
    %v877 = vpack.c.bf16 %v820, %v819
    %v878 = vpack.c.bf16 %v822, %v821
    %v879 = vpack.c.bf16 %v823, %v823
    %v880 = vpack.c.bf16 %v825, %v824
    %v881 = vpack.c.bf16 %v827, %v826
    %v882 = vpack.c.bf16 %v829, %v828
    %v883 = vpack.c.bf16 %v831, %v830
    %v884 = vpack.c.bf16 %v832, %v832
    %v885 = vpack.c.bf16 %v834, %v833
    %v886 = vpack.c.bf16 %v836, %v835
    %v887 = vpack.c.bf16 %v838, %v837
    %v888 = vpack.c.bf16 %v840, %v839
    %v889 = vpack.c.bf16 %v841, %v841
    %v890 = vpack.c.bf16 %v843, %v842
    %v891 = vpack.c.bf16 %v845, %v844
    %v892 = vpack.c.bf16 %v847, %v846
    %v893 = vpack.c.bf16 %v849, %v848
    %v894 = vpack.c.bf16 %v850, %v850
    %v895 = vpack.c.bf16 %v852, %v851
    %v896 = vpack.c.bf16 %v854, %v853
    %v897 = vpack.c.bf16 %v856, %v855
    %v898 = vpack.c.bf16 %v858, %v857
    %v899 = vpack.c.bf16 %v859, %v859
    %v900 = vpack.c.bf16 %v34, %v34
    %v902 = vsel %vm49, %v900, 0
    %vm904 = vcmask 1043456
    %v906 = vsel %vm904, %v864, 0
    %908 = vmatprep.subr.bf16.mxu0 0
    %909 = vmatpush1.bf16.msra.mxu0 %v860
    %910 = vmatprep.subr.bf16.mxu0 0
    %911 = vmatpush1.bf16.msra.mxu0 %v861
    %912 = vmatprep.subr.bf16.mxu0 0
    %913 = vmatpush1.bf16.msra.mxu0 %v862
    %914 = vmatprep.subr.bf16.mxu0 0
    %915 = vmatpush1.bf16.msra.mxu0 %v863
    %916 = vmatprep.subr.bf16.mxu0 0
    %917 = vmatpush1.bf16.msra.mxu0 %v906
    %918 = vmatprep.subr.bf16.mxu0 0
    %919 = vmatpush1.bf16.msra.mxu0 0
    %920 = vmatprep.subr.bf16.mxu0 0
    %921 = vmatpush1.bf16.msra.mxu0 0
    %922 = vmatprep.subr.bf16.mxu0 0
    %923 = vmatpush1.bf16.msra.mxu0 0
    %924 = vmatprep.subr.bf16.mxu0 0
    %925 = vmatpush1.bf16.msra.mxu0 0
    %926 = vmatprep.subr.bf16.mxu0 0
    %927 = vmatpush1.bf16.msra.mxu0 0
    %928 = vmatprep.subr.bf16.mxu0 0
    %929 = vmatpush1.bf16.msra.mxu0 0
    %930 = vmatprep.subr.bf16.mxu0 0
    %931 = vmatpush1.bf16.msra.mxu0 0
    %932 = vmatprep.subr.bf16.mxu0 0
    %933 = vmatpush1.bf16.msra.mxu0 0
    %934 = vmatprep.subr.bf16.mxu0 0
    %935 = vmatpush1.bf16.msra.mxu0 0
    %936 = vmatprep.subr.bf16.mxu0 0
    %937 = vmatpush1.bf16.msra.mxu0 0
    %938 = vmatprep.subr.bf16.mxu0 0
    %939 = vmatpush1.bf16.msra.mxu0 0
    %940 = vmatprep.mubr.bf16.mxu0 0
    %941 = vmatmul.mubr.bf16.gmra.mrb[0].mxu0 %v902
    %v942 = vpop.f32.mrb[0].mxu0
    %v943 = vadd.f32 0.0, %v942
    %v944 = vpop.f32.mrb[0].mxu0
    %v945 = vpop.f32.mrb[0].mxu0
    %v946 = vpop.f32.mrb[0].mxu0
    %947 = vdwg.mxu0
    %v949 = vsel %vm904, %v869, 0
    %951 = vmatprep.subr.bf16.mxu0 0
    %952 = vmatpush1.bf16.msra.mxu0 %v865
    %953 = vmatprep.subr.bf16.mxu0 0
    %954 = vmatpush1.bf16.msra.mxu0 %v866
    %955 = vmatprep.subr.bf16.mxu0 0
    %956 = vmatpush1.bf16.msra.mxu0 %v867
    %957 = vmatprep.subr.bf16.mxu0 0
    %958 = vmatpush1.bf16.msra.mxu0 %v868
    %959 = vmatprep.subr.bf16.mxu0 0
    %960 = vmatpush1.bf16.msra.mxu0 %v949
    %961 = vmatprep.subr.bf16.mxu0 0
    %962 = vmatpush1.bf16.msra.mxu0 0
    %963 = vmatprep.subr.bf16.mxu0 0
    %964 = vmatpush1.bf16.msra.mxu0 0
    %965 = vmatprep.subr.bf16.mxu0 0
    %966 = vmatpush1.bf16.msra.mxu0 0
    %967 = vmatprep.subr.bf16.mxu0 0
    %968 = vmatpush1.bf16.msra.mxu0 0
    %969 = vmatprep.subr.bf16.mxu0 0
    %970 = vmatpush1.bf16.msra.mxu0 0
    %971 = vmatprep.subr.bf16.mxu0 0
    %972 = vmatpush1.bf16.msra.mxu0 0
    %973 = vmatprep.subr.bf16.mxu0 0
    %974 = vmatpush1.bf16.msra.mxu0 0
    %975 = vmatprep.subr.bf16.mxu0 0
    %976 = vmatpush1.bf16.msra.mxu0 0
    %977 = vmatprep.subr.bf16.mxu0 0
    %978 = vmatpush1.bf16.msra.mxu0 0
    %979 = vmatprep.subr.bf16.mxu0 0
    %980 = vmatpush1.bf16.msra.mxu0 0
    %981 = vmatprep.subr.bf16.mxu0 0
    %982 = vmatpush1.bf16.msra.mxu0 0
    %983 = vmatprep.mubr.bf16.mxu0 0
    %984 = vmatmul.mubr.bf16.gmra.mrb[0].mxu0 %v902
    %v985 = vpop.f32.mrb[0].mxu0
    %v986 = vadd.f32 0.0, %v985
    %v987 = vpop.f32.mrb[0].mxu0
    %v988 = vpop.f32.mrb[0].mxu0
    %v989 = vpop.f32.mrb[0].mxu0
    %990 = vdwg.mxu0
    %v992 = vsel %vm904, %v874, 0
    %994 = vmatprep.subr.bf16.mxu0 0
    %995 = vmatpush1.bf16.msra.mxu0 %v870
    %996 = vmatprep.subr.bf16.mxu0 0
    %997 = vmatpush1.bf16.msra.mxu0 %v871
    %998 = vmatprep.subr.bf16.mxu0 0
    %999 = vmatpush1.bf16.msra.mxu0 %v872
    %1000 = vmatprep.subr.bf16.mxu0 0
    %1001 = vmatpush1.bf16.msra.mxu0 %v873
    %1002 = vmatprep.subr.bf16.mxu0 0
    %1003 = vmatpush1.bf16.msra.mxu0 %v992
    %1004 = vmatprep.subr.bf16.mxu0 0
    %1005 = vmatpush1.bf16.msra.mxu0 0
    %1006 = vmatprep.subr.bf16.mxu0 0
    %1007 = vmatpush1.bf16.msra.mxu0 0
    %1008 = vmatprep.subr.bf16.mxu0 0
    %1009 = vmatpush1.bf16.msra.mxu0 0
    %1010 = vmatprep.subr.bf16.mxu0 0
    %1011 = vmatpush1.bf16.msra.mxu0 0
    %1012 = vmatprep.subr.bf16.mxu0 0
    %1013 = vmatpush1.bf16.msra.mxu0 0
    %1014 = vmatprep.subr.bf16.mxu0 0
    %1015 = vmatpush1.bf16.msra.mxu0 0
    %1016 = vmatprep.subr.bf16.mxu0 0
    %1017 = vmatpush1.bf16.msra.mxu0 0
    %1018 = vmatprep.subr.bf16.mxu0 0
    %1019 = vmatpush1.bf16.msra.mxu0 0
    %1020 = vmatprep.subr.bf16.mxu0 0
    %1021 = vmatpush1.bf16.msra.mxu0 0
    %1022 = vmatprep.subr.bf16.mxu0 0
    %1023 = vmatpush1.bf16.msra.mxu0 0
    %1024 = vmatprep.subr.bf16.mxu0 0
    %1025 = vmatpush1.bf16.msra.mxu0 0
    %1026 = vmatprep.mubr.bf16.mxu0 0
    %1027 = vmatmul.mubr.bf16.gmra.mrb[0].mxu0 %v902
    %v1028 = vpop.f32.mrb[0].mxu0
    %v1029 = vadd.f32 0.0, %v1028
    %v1030 = vpop.f32.mrb[0].mxu0
    %v1031 = vpop.f32.mrb[0].mxu0
    %v1032 = vpop.f32.mrb[0].mxu0
    %1033 = vdwg.mxu0
    %v1035 = vsel %vm904, %v879, 0
    %1037 = vmatprep.subr.bf16.mxu0 0
    %1038 = vmatpush1.bf16.msra.mxu0 %v875
    %1039 = vmatprep.subr.bf16.mxu0 0
    %1040 = vmatpush1.bf16.msra.mxu0 %v876
    %1041 = vmatprep.subr.bf16.mxu0 0
    %1042 = vmatpush1.bf16.msra.mxu0 %v877
    %1043 = vmatprep.subr.bf16.mxu0 0
    %1044 = vmatpush1.bf16.msra.mxu0 %v878
    %1045 = vmatprep.subr.bf16.mxu0 0
    %1046 = vmatpush1.bf16.msra.mxu0 %v1035
    %1047 = vmatprep.subr.bf16.mxu0 0
    %1048 = vmatpush1.bf16.msra.mxu0 0
    %1049 = vmatprep.subr.bf16.mxu0 0
    %1050 = vmatpush1.bf16.msra.mxu0 0
    %1051 = vmatprep.subr.bf16.mxu0 0
    %1052 = vmatpush1.bf16.msra.mxu0 0
    %1053 = vmatprep.subr.bf16.mxu0 0
    %1054 = vmatpush1.bf16.msra.mxu0 0
    %1055 = vmatprep.subr.bf16.mxu0 0
    %1056 = vmatpush1.bf16.msra.mxu0 0
    %1057 = vmatprep.subr.bf16.mxu0 0
    %1058 = vmatpush1.bf16.msra.mxu0 0
    %1059 = vmatprep.subr.bf16.mxu0 0
    %1060 = vmatpush1.bf16.msra.mxu0 0
    %1061 = vmatprep.subr.bf16.mxu0 0
    %1062 = vmatpush1.bf16.msra.mxu0 0
    %1063 = vmatprep.subr.bf16.mxu0 0
    %1064 = vmatpush1.bf16.msra.mxu0 0
    %1065 = vmatprep.subr.bf16.mxu0 0
    %1066 = vmatpush1.bf16.msra.mxu0 0
    %1067 = vmatprep.subr.bf16.mxu0 0
    %1068 = vmatpush1.bf16.msra.mxu0 0
    %1069 = vmatprep.mubr.bf16.mxu0 0
    %1070 = vmatmul.mubr.bf16.gmra.mrb[0].mxu0 %v902
    %v1071 = vpop.f32.mrb[0].mxu0
    %v1072 = vadd.f32 0.0, %v1071
    %v1073 = vpop.f32.mrb[0].mxu0
    %v1074 = vpop.f32.mrb[0].mxu0
    %v1075 = vpop.f32.mrb[0].mxu0
    %1076 = vdwg.mxu0
    %v1078 = vsel %vm904, %v884, 0
    %1080 = vmatprep.subr.bf16.mxu0 0
    %1081 = vmatpush1.bf16.msra.mxu0 %v880
    %1082 = vmatprep.subr.bf16.mxu0 0
    %1083 = vmatpush1.bf16.msra.mxu0 %v881
    %1084 = vmatprep.subr.bf16.mxu0 0
    %1085 = vmatpush1.bf16.msra.mxu0 %v882
    %1086 = vmatprep.subr.bf16.mxu0 0
    %1087 = vmatpush1.bf16.msra.mxu0 %v883
    %1088 = vmatprep.subr.bf16.mxu0 0
    %1089 = vmatpush1.bf16.msra.mxu0 %v1078
    %1090 = vmatprep.subr.bf16.mxu0 0
    %1091 = vmatpush1.bf16.msra.mxu0 0
    %1092 = vmatprep.subr.bf16.mxu0 0
    %1093 = vmatpush1.bf16.msra.mxu0 0
    %1094 = vmatprep.subr.bf16.mxu0 0
    %1095 = vmatpush1.bf16.msra.mxu0 0
    %1096 = vmatprep.subr.bf16.mxu0 0
    %1097 = vmatpush1.bf16.msra.mxu0 0
    %1098 = vmatprep.subr.bf16.mxu0 0
    %1099 = vmatpush1.bf16.msra.mxu0 0
    %1100 = vmatprep.subr.bf16.mxu0 0
    %1101 = vmatpush1.bf16.msra.mxu0 0
    %1102 = vmatprep.subr.bf16.mxu0 0
    %1103 = vmatpush1.bf16.msra.mxu0 0
    %1104 = vmatprep.subr.bf16.mxu0 0
    %1105 = vmatpush1.bf16.msra.mxu0 0
    %1106 = vmatprep.subr.bf16.mxu0 0
    %1107 = vmatpush1.bf16.msra.mxu0 0
    %1108 = vmatprep.subr.bf16.mxu0 0
    %1109 = vmatpush1.bf16.msra.mxu0 0
    %1110 = vmatprep.subr.bf16.mxu0 0
    %1111 = vmatpush1.bf16.msra.mxu0 0
    %1112 = vmatprep.mubr.bf16.mxu0 0
    %1113 = vmatmul.mubr.bf16.gmra.mrb[0].mxu0 %v902
    %v1114 = vpop.f32.mrb[0].mxu0
    %v1115 = vadd.f32 0.0, %v1114
    %v1116 = vpop.f32.mrb[0].mxu0
    %v1117 = vpop.f32.mrb[0].mxu0
    %v1118 = vpop.f32.mrb[0].mxu0
    %1119 = vdwg.mxu0
    %v1121 = vsel %vm904, %v889, 0
    %1123 = vmatprep.subr.bf16.mxu0 0
    %1124 = vmatpush1.bf16.msra.mxu0 %v885
    %1125 = vmatprep.subr.bf16.mxu0 0
    %1126 = vmatpush1.bf16.msra.mxu0 %v886
    %1127 = vmatprep.subr.bf16.mxu0 0
    %1128 = vmatpush1.bf16.msra.mxu0 %v887
    %1129 = vmatprep.subr.bf16.mxu0 0
    %1130 = vmatpush1.bf16.msra.mxu0 %v888
    %1131 = vmatprep.subr.bf16.mxu0 0
    %1132 = vmatpush1.bf16.msra.mxu0 %v1121
    %1133 = vmatprep.subr.bf16.mxu0 0
    %1134 = vmatpush1.bf16.msra.mxu0 0
    %1135 = vmatprep.subr.bf16.mxu0 0
    %1136 = vmatpush1.bf16.msra.mxu0 0
    %1137 = vmatprep.subr.bf16.mxu0 0
    %1138 = vmatpush1.bf16.msra.mxu0 0
    %1139 = vmatprep.subr.bf16.mxu0 0
    %1140 = vmatpush1.bf16.msra.mxu0 0
    %1141 = vmatprep.subr.bf16.mxu0 0
    %1142 = vmatpush1.bf16.msra.mxu0 0
    %1143 = vmatprep.subr.bf16.mxu0 0
    %1144 = vmatpush1.bf16.msra.mxu0 0
    %1145 = vmatprep.subr.bf16.mxu0 0
    %1146 = vmatpush1.bf16.msra.mxu0 0
    %1147 = vmatprep.subr.bf16.mxu0 0
    %1148 = vmatpush1.bf16.msra.mxu0 0
    %1149 = vmatprep.subr.bf16.mxu0 0
    %1150 = vmatpush1.bf16.msra.mxu0 0
    %1151 = vmatprep.subr.bf16.mxu0 0
    %1152 = vmatpush1.bf16.msra.mxu0 0
    %1153 = vmatprep.subr.bf16.mxu0 0
    %1154 = vmatpush1.bf16.msra.mxu0 0
    %1155 = vmatprep.mubr.bf16.mxu0 0
    %1156 = vmatmul.mubr.bf16.gmra.mrb[0].mxu0 %v902
    %v1157 = vpop.f32.mrb[0].mxu0
    %v1158 = vadd.f32 0.0, %v1157
    %v1159 = vpop.f32.mrb[0].mxu0
    %v1160 = vpop.f32.mrb[0].mxu0
    %v1161 = vpop.f32.mrb[0].mxu0
    %1162 = vdwg.mxu0
    %v1164 = vsel %vm904, %v894, 0
    %1166 = vmatprep.subr.bf16.mxu0 0
    %1167 = vmatpush1.bf16.msra.mxu0 %v890
    %1168 = vmatprep.subr.bf16.mxu0 0
    %1169 = vmatpush1.bf16.msra.mxu0 %v891
    %1170 = vmatprep.subr.bf16.mxu0 0
    %1171 = vmatpush1.bf16.msra.mxu0 %v892
    %1172 = vmatprep.subr.bf16.mxu0 0
    %1173 = vmatpush1.bf16.msra.mxu0 %v893
    %1174 = vmatprep.subr.bf16.mxu0 0
    %1175 = vmatpush1.bf16.msra.mxu0 %v1164
    %1176 = vmatprep.subr.bf16.mxu0 0
    %1177 = vmatpush1.bf16.msra.mxu0 0
    %1178 = vmatprep.subr.bf16.mxu0 0
    %1179 = vmatpush1.bf16.msra.mxu0 0
    %1180 = vmatprep.subr.bf16.mxu0 0
    %1181 = vmatpush1.bf16.msra.mxu0 0
    %1182 = vmatprep.subr.bf16.mxu0 0
    %1183 = vmatpush1.bf16.msra.mxu0 0
    %1184 = vmatprep.subr.bf16.mxu0 0
    %1185 = vmatpush1.bf16.msra.mxu0 0
    %1186 = vmatprep.subr.bf16.mxu0 0
    %1187 = vmatpush1.bf16.msra.mxu0 0
    %1188 = vmatprep.subr.bf16.mxu0 0
    %1189 = vmatpush1.bf16.msra.mxu0 0
    %1190 = vmatprep.subr.bf16.mxu0 0
    %1191 = vmatpush1.bf16.msra.mxu0 0
    %1192 = vmatprep.subr.bf16.mxu0 0
    %1193 = vmatpush1.bf16.msra.mxu0 0
    %1194 = vmatprep.subr.bf16.mxu0 0
    %1195 = vmatpush1.bf16.msra.mxu0 0
    %1196 = vmatprep.subr.bf16.mxu0 0
    %1197 = vmatpush1.bf16.msra.mxu0 0
    %1198 = vmatprep.mubr.bf16.mxu0 0
    %1199 = vmatmul.mubr.bf16.gmra.mrb[0].mxu0 %v902
    %v1200 = vpop.f32.mrb[0].mxu0
    %v1201 = vadd.f32 0.0, %v1200
    %v1202 = vpop.f32.mrb[0].mxu0
    %v1203 = vpop.f32.mrb[0].mxu0
    %v1204 = vpop.f32.mrb[0].mxu0
    %1205 = vdwg.mxu0
    %v1207 = vsel %vm904, %v899, 0
    %1209 = vmatprep.subr.bf16.mxu0 0
    %1210 = vmatpush1.bf16.msra.mxu0 %v895
    %1211 = vmatprep.subr.bf16.mxu0 0
    %1212 = vmatpush1.bf16.msra.mxu0 %v896
    %1213 = vmatprep.subr.bf16.mxu0 0
    %1214 = vmatpush1.bf16.msra.mxu0 %v897
    %1215 = vmatprep.subr.bf16.mxu0 0
    %1216 = vmatpush1.bf16.msra.mxu0 %v898
    %1217 = vmatprep.subr.bf16.mxu0 0
    %1218 = vmatpush1.bf16.msra.mxu0 %v1207
    %1219 = vmatprep.subr.bf16.mxu0 0
    %1220 = vmatpush1.bf16.msra.mxu0 0
    %1221 = vmatprep.subr.bf16.mxu0 0
    %1222 = vmatpush1.bf16.msra.mxu0 0
    %1223 = vmatprep.subr.bf16.mxu0 0
    %1224 = vmatpush1.bf16.msra.mxu0 0
    %1225 = vmatprep.subr.bf16.mxu0 0
    %1226 = vmatpush1.bf16.msra.mxu0 0
    %1227 = vmatprep.subr.bf16.mxu0 0
    %1228 = vmatpush1.bf16.msra.mxu0 0
    %1229 = vmatprep.subr.bf16.mxu0 0
    %1230 = vmatpush1.bf16.msra.mxu0 0
    %1231 = vmatprep.subr.bf16.mxu0 0
    %1232 = vmatpush1.bf16.msra.mxu0 0
    %1233 = vmatprep.subr.bf16.mxu0 0
    %1234 = vmatpush1.bf16.msra.mxu0 0
    %1235 = vmatprep.subr.bf16.mxu0 0
    %1236 = vmatpush1.bf16.msra.mxu0 0
    %1237 = vmatprep.subr.bf16.mxu0 0
    %1238 = vmatpush1.bf16.msra.mxu0 0
    %1239 = vmatprep.subr.bf16.mxu0 0
    %1240 = vmatpush1.bf16.msra.mxu0 0
    %1241 = vmatprep.mubr.bf16.mxu0 0
    %1242 = vmatmul.mubr.bf16.gmra.mrb[0].mxu0 %v902
    %v1243 = vpop.f32.mrb[0].mxu0
    %v1244 = vadd.f32 0.0, %v1243
    %v1245 = vpop.f32.mrb[0].mxu0
    %v1246 = vpop.f32.mrb[0].mxu0
    %v1247 = vpop.f32.mrb[0].mxu0
    %1248 = vdwg.mxu0
    %v1249 = vsub.f32 %v943, 1.0
    %v1250 = vsub.f32 %v986, 1.0
    %v1251 = vsub.f32 %v1029, 1.0
    %v1252 = vsub.f32 %v1072, 1.0
    %v1253 = vsub.f32 %v1115, 1.0
    %v1254 = vsub.f32 %v1158, 1.0
    %v1255 = vsub.f32 %v1201, 1.0
    %v1256 = vsub.f32 %v1244, 1.0
    %s1257 = sld [smem:[#allocation2]]
    %vm1258 = vcmp.lt.s32.totalorder %v432, 72
    %v1259 = vstv %s1257
    %vm1260 = vcmp.le.f32.partialorder %v943, %v1259
    %vm1261 = vcmp.le.f32.partialorder %v986, %v1259
    %vm1262 = vcmp.le.f32.partialorder %v1029, %v1259
    %vm1263 = vcmp.le.f32.partialorder %v1072, %v1259
    %vm1264 = vcmp.le.f32.partialorder %v1115, %v1259
    %vm1265 = vcmp.le.f32.partialorder %v1158, %v1259
    %vm1266 = vcmp.le.f32.partialorder %v1201, %v1259
    %vm1267 = vcmp.le.f32.partialorder %v1244, %v1259
    %v1268 = vsel %vm1258, 1, 0
    %vm1269 = vcmp.eq.s32.totalorder %v1268, 1
    %vm1270 = vmand %vm1269, %vm1260
    %vm1271 = vmand %vm1269, %vm1261
    %vm1272 = vmand %vm1269, %vm1262
    %vm1273 = vmand %vm1269, %vm1263
    %vm1274 = vmand %vm1269, %vm1264
    %vm1275 = vmand %vm1269, %vm1265
    %vm1276 = vmand %vm1269, %vm1266
    %vm1277 = vmand %vm1269, %vm1267
    %v1278 = vsel %vm1270, 1.0, 0.0
    %v1279 = vsel %vm1271, 1.0, 0.0
    %v1280 = vsel %vm1272, 1.0, 0.0
    %v1281 = vsel %vm1273, 1.0, 0.0
    %v1282 = vsel %vm1274, 1.0, 0.0
    %v1283 = vsel %vm1275, 1.0, 0.0
    %v1284 = vsel %vm1276, 1.0, 0.0
    %v1285 = vsel %vm1277, 1.0, 0.0
    %vm1286 = vcmask 1041409
    %v1287 = vsel %vm1286, %v1278, 0.0
    %1288 = vadd.xlane.f32.xlu0 %v1287
    %v1289 = vpop.xlane.xlu0 %1288
    %v1290 = vsel %vm1286, %v1279, 0.0
    %1291 = vadd.xlane.f32.xlu0 %v1290
    %v1292 = vpop.xlane.xlu0 %1291
    %v1293 = vsel %vm1286, %v1280, 0.0
    %1294 = vadd.xlane.f32.xlu0 %v1293
    %v1295 = vpop.xlane.xlu0 %1294
    %v1296 = vsel %vm1286, %v1281, 0.0
    %1297 = vadd.xlane.f32.xlu0 %v1296
    %v1298 = vpop.xlane.xlu0 %1297
    %v1299 = vsel %vm1286, %v1282, 0.0
    %1300 = vadd.xlane.f32.xlu0 %v1299
    %v1301 = vpop.xlane.xlu0 %1300
    %v1302 = vsel %vm1286, %v1283, 0.0
    %1303 = vadd.xlane.f32.xlu0 %v1302
    %v1304 = vpop.xlane.xlu0 %1303
    %v1305 = vsel %vm1286, %v1284, 0.0
    %1306 = vadd.xlane.f32.xlu0 %v1305
    %v1307 = vpop.xlane.xlu0 %1306
    %v1308 = vsel %vm1286, %v1285, 0.0
    %1309 = vadd.xlane.f32.xlu0 %v1308
    %v1310 = vpop.xlane.xlu0 %1309
    %v1311 = vsub.f32 %v1289, 1.0
    %v1312 = vsub.f32 %v1292, 1.0
    %v1313 = vsub.f32 %v1295, 1.0
    %v1314 = vsub.f32 %v1298, 1.0
    %v1315 = vsub.f32 %v1301, 1.0
    %v1316 = vsub.f32 %v1304, 1.0
    %v1317 = vsub.f32 %v1307, 1.0
    %v1318 = vsub.f32 %v1310, 1.0
    %v1319 = vmax.f32 %v1311, 0.0
    %v1320 = vmax.f32 %v1312, 0.0
    %v1321 = vmax.f32 %v1313, 0.0
    %v1322 = vmax.f32 %v1314, 0.0
    %v1323 = vmax.f32 %v1315, 0.0
    %v1324 = vmax.f32 %v1316, 0.0
    %v1325 = vmax.f32 %v1317, 0.0
    %v1326 = vmax.f32 %v1318, 0.0
    %v1327 = vmin.f32 %v1319, 71.0
    %v1328 = vmin.f32 %v1320, 71.0
    %v1329 = vmin.f32 %v1321, 71.0
    %v1330 = vmin.f32 %v1322, 71.0
    %v1331 = vmin.f32 %v1323, 71.0
    %v1332 = vmin.f32 %v1324, 71.0
    %v1333 = vmin.f32 %v1325, 71.0
    %v1334 = vmin.f32 %v1326, 71.0
    %v1343 = vrot.slane %v1327, 1
    %v1344 = vrot.slane %v1328, 1
    %v1345 = vrot.slane %v1329, 1
    %v1346 = vrot.slane %v1330, 1
    %v1347 = vrot.slane %v1331, 1
    %v1348 = vrot.slane %v1332, 1
    %v1349 = vrot.slane %v1333, 1
    %v1350 = vrot.slane %v1334, 1
    %vm1359 = vcmp.eq.f32.partialorder %v1249, %v1343
    %vm1360 = vcmp.eq.f32.partialorder %v1250, %v1344
    %vm1361 = vcmp.eq.f32.partialorder %v1251, %v1345
    %vm1362 = vcmp.eq.f32.partialorder %v1252, %v1346
    %vm1363 = vcmp.eq.f32.partialorder %v1253, %v1347
    %vm1364 = vcmp.eq.f32.partialorder %v1254, %v1348
    %vm1365 = vcmp.eq.f32.partialorder %v1255, %v1349
    %vm1366 = vcmp.eq.f32.partialorder %v1256, %v1350
    %vm1367 = vmand %vm1269, %vm1359
    %vm1368 = vmand %vm1269, %vm1360
    %vm1369 = vmand %vm1269, %vm1361
    %vm1370 = vmand %vm1269, %vm1362
    %vm1371 = vmand %vm1269, %vm1363
    %vm1372 = vmand %vm1269, %vm1364
    %vm1373 = vmand %vm1269, %vm1365
    %vm1374 = vmand %vm1269, %vm1366
    %v1375 = vsel %vm1367, %v387, 0.0
    %v1376 = vsel %vm1368, %v401, 0.0
    %v1377 = vsel %vm1369, %v409, 0.0
    %v1378 = vsel %vm1370, %v411, 0.0
    %v1379 = vsel %vm1371, %v394, 0.0
    %v1380 = vsel %vm1372, %v408, 0.0
    %v1381 = vsel %vm1373, %v410, 0.0
    %v1382 = vsel %vm1374, %v412, 0.0
    %vm1383 = vcmask 1040384
    %v1384 = vsel %vm1383, %v1375, 0.0
    %1385 = vadd.xlane.f32.xlu0 %v1384
    %v1386 = vpop.xlane.xlu0 %1385
    %v1387 = vsel %vm1383, %v1376, 0.0
    %1388 = vadd.xlane.f32.xlu0 %v1387
    %v1389 = vpop.xlane.xlu0 %1388
    %v1390 = vsel %vm1383, %v1377, 0.0
    %1391 = vadd.xlane.f32.xlu0 %v1390
    %v1392 = vpop.xlane.xlu0 %1391
    %v1393 = vsel %vm1383, %v1378, 0.0
    %1394 = vadd.xlane.f32.xlu0 %v1393
    %v1395 = vpop.xlane.xlu0 %1394
    %v1396 = vsel %vm1383, %v1379, 0.0
    %1397 = vadd.xlane.f32.xlu0 %v1396
    %v1398 = vpop.xlane.xlu0 %1397
    %v1399 = vsel %vm1383, %v1380, 0.0
    %1400 = vadd.xlane.f32.xlu0 %v1399
    %v1401 = vpop.xlane.xlu0 %1400
    %v1402 = vsel %vm1383, %v1381, 0.0
    %1403 = vadd.xlane.f32.xlu0 %v1402
    %v1404 = vpop.xlane.xlu0 %1403
    %v1405 = vsel %vm1383, %v1382, 0.0
    %1406 = vadd.xlane.f32.xlu0 %v1405
    %v1407 = vpop.xlane.xlu0 %1406
    %v1408 = vlaneseq
    %v1409 = vshrl.u32 %v1408, 7
    %v1410 = vsub.s32 0, %v1409
    %v1411 = vrot.slane %v1386, %v1410
    %v1412 = vlaneseq
    %v1413 = vshrl.u32 %v1412, 7
    %v1414 = vsub.s32 0, %v1413
    %v1415 = vrot.slane %v1389, %v1414
    %v1416 = vlaneseq
    %v1417 = vshrl.u32 %v1416, 7
    %v1418 = vsub.s32 0, %v1417
    %v1419 = vrot.slane %v1392, %v1418
    %v1420 = vlaneseq
    %v1421 = vshrl.u32 %v1420, 7
    %v1422 = vsub.s32 0, %v1421
    %v1423 = vrot.slane %v1395, %v1422
    %v1424 = vlaneseq
    %v1425 = vshrl.u32 %v1424, 7
    %v1426 = vsub.s32 0, %v1425
    %v1427 = vrot.slane %v1398, %v1426
    %v1428 = vlaneseq
    %v1429 = vshrl.u32 %v1428, 7
    %v1430 = vsub.s32 0, %v1429
    %v1431 = vrot.slane %v1401, %v1430
    %v1432 = vlaneseq
    %v1433 = vshrl.u32 %v1432, 7
    %v1434 = vsub.s32 0, %v1433
    %v1435 = vrot.slane %v1404, %v1434
    %v1436 = vlaneseq
    %v1437 = vshrl.u32 %v1436, 7
    %v1438 = vsub.s32 0, %v1437
    %v1439 = vrot.slane %v1407, %v1438
    %v1448 = vsel %vm1286, %v1415, %v1411
    %vm1449 = vcmask 1042434
    %v1450 = vsel %vm1449, %v1419, %v1448
    %vm1451 = vcmask 1043459
    %v1452 = vsel %vm1451, %v1423, %v1450
    %vm1453 = vcmask 1044484
    %v1454 = vsel %vm1453, %v1427, %v1452
    %vm1455 = vcmask 1045509
    %v1456 = vsel %vm1455, %v1431, %v1454
    %vm1457 = vcmask 1046534
    %v1458 = vsel %vm1457, %v1435, %v1456
    %vm1459 = vcmask 1047559
    %v1460 = vsel %vm1459, %v1439, %v1458
    %1462 = vst [vmem:[#allocation6] sm:$0xff] %v1460
    // Predicated region
    $region22: #{tpu_custom_call.1} parent=1 // pred_check
      _
    $region23: #{tpu_custom_call.1} parent=1 // pred_check_branch
      %1464 = sbr.rel (0) target = $region25
    $region24: #{tpu_custom_call.1} parent=1 // pred_region
      %s1466 = ssub.s32 128, 128
      %1467 = vsyncadd [#allocation5], %s1466
      %s1469 = sshll.u32 [#allocation6], 4
      %s1470 = int_to_ptr.vmem [resolvable:$true] %s1469
      %1472 = dma.vmem_to_hbm [thread:$0]  %s1470, 128, %s4, [#allocation5]
    $region25: #{tpu_custom_call.1} parent=1 // pred_fallthru
      _
    // Predicated region
    $region26: #{tpu_custom_call.1} parent=1 // pred_check
      _
    $region27: #{tpu_custom_call.1} parent=1 // pred_check_branch
      %1474 = sbr.rel (0) target = $region29
    $region28: #{tpu_custom_call.1} parent=1 // pred_region
      %1475 = dma.done [#allocation5], 128
    $region29: #{tpu_custom_call.1} parent=1 // pred_fallthru
      _
    %1476 = vsyncpa [#allocation4], 1
    %1477 = vsyncpa [#allocation5], 1

</llo_original>
